<compile_context>
chip_gen: v7x
topology: tpu7x:2x2x1
jax: 0.10.0
libtpu: 0.0.40
codegen_flags: <defaults>
</compile_context>

<pallas_src>
import functools

import jax
import jax.numpy as jnp
from jax import lax
from jax.experimental import pallas as pl
from jax.experimental.pallas import tpu as pltpu

LANES = 128
MAX_BLOCK_BYTES = 2 * 1024 * 1024   # per-input block; 2 inputs x 2 buffers = 8 MiB VMEM (v5e-safe)
MIN_SPLIT_ROWS = 1024               # only use the 2-way split when each half has >= this many rows
NEG_PAD = -1.0e4                    # padded logit: max(x,0)=0, x*y=0, exp(-|x|) underflows -> 0 loss


def _bce_kernel(x_ref, y_ref, out_ref, acc_ref, *, inv_n, valid_rows, row_tile):
    """Accumulate the BCE-with-logits loss of one (row_tile, 128) block into a
    single (8, 128) f32 vreg accumulator; emit the 1/N-scaled partial on the
    last inner step."""
    i = pl.program_id(1)  # inner reduction axis ("arbitrary")

    @pl.when(i == 0)
    def _():
        acc_ref[...] = jnp.zeros_like(acc_ref)

    x = x_ref[0].astype(jnp.float32)   # (row_tile, LANES); cast on-chip
    y = y_ref[0].astype(jnp.float32)

    # Numerically stable BCE with logits: max(x, 0) - x*y + log1p(exp(-|x|))
    # (VPU for max/mul/add/abs, EUP for exp/log1p -- kept minimal on purpose).
    loss = jnp.maximum(x, 0.0) - x * y + jnp.log1p(jnp.exp(-jnp.abs(x)))

    if valid_rows % row_tile != 0:
        # Ragged edge: the last inner block only partially covers real rows; its
        # out-of-range rows contain undefined VMEM data and MUST contribute zero.
        # (Trivially all-true for full blocks; ~2 VPU ops per vreg.)
        start = i * row_tile
        row_id = lax.broadcasted_iota(jnp.int32, (row_tile, 1), 0)
        loss = jnp.where(row_id < (valid_rows - start), loss, 0.0)

    # Tile-aligned fold to one (8, 128) vreg: pure VPU adds, no cross-lane work.
    acc_ref[...] += jnp.sum(loss.reshape(row_tile // 8, 8, LANES), axis=0)

    @pl.when(i == pl.num_programs(1) - 1)
    def _():
        out_ref[0] = acc_ref[...] * jnp.float32(inv_n)


def bce_with_logits_loss(inputs, targets):
    """Mean BCE-with-logits over all elements (matches nn.BCEWithLogitsLoss)."""
    assert inputs.shape == targets.shape
    n_elems = inputs.size
    assert n_elems > 0

    is_x = jnp.dtype(inputs.dtype).itemsize
    is_y = jnp.dtype(targets.dtype).itemsize
    # Native sublane tile for the narrowest input dtype (8 f32 / 16 bf16 / 32 i8).
    sub = max(8, 8 * (4 // min(is_x, is_y)))
    # ~2 MiB blocks for the widest dtype; always a multiple of `sub`.
    max_row_tile = max(sub, MAX_BLOCK_BYTES // (LANES * max(is_x, is_y)))

    rows = pl.cdiv(n_elems, LANES)
    pad_rows = max(rows, sub)            # at least one full sublane tile
    pad = pad_rows * LANES - n_elems

    x_flat = inputs.reshape(-1)
    y_flat = targets.reshape(-1)
    if pad:
        # Fallback only (n % 128 != 0, or tiny input): padded logits contribute
        # exactly zero loss. Common NN shapes take the copy-free path (pad == 0).
        x_flat = jnp.pad(x_flat, (0, pad), constant_values=NEG_PAD)
        y_flat = jnp.pad(y_flat, (0, pad), constant_values=0)
    rows = pad_rows

    # 2-way leading "parallel" axis so v7x's two TensorCores each reduce half of
    # the real rows; skipped for small inputs (near-free extra grid level on
    # single-TC v5e/v6e either way).
    n_par = 2 if (rows % 2 == 0 and rows // 2 >= max(MIN_SPLIT_ROWS, sub)) else 1
    rows_per_par = rows // n_par

    row_tile = min(max_row_tile, (rows_per_par // sub) * sub)
    n_inner = pl.cdiv(rows_per_par, row_tile)

    x3 = x_flat.reshape(n_par, rows_per_par, LANES)   # copy-free reshape
    y3 = y_flat.reshape(n_par, rows_per_par, LANES)

    inv_n = 1.0 / float(n_elems)  # compile-time constant; multiply, not divide
    kernel = functools.partial(_bce_kernel, inv_n=inv_n,
                               valid_rows=rows_per_par, row_tile=row_tile)

    in_spec = pl.BlockSpec((1, row_tile, LANES), lambda p, i: (p, i, 0))

    partials = pl.pallas_call(
        kernel,
        out_shape=jax.ShapeDtypeStruct((n_par, 8, LANES), jnp.float32),
        grid_spec=pltpu.PrefetchScalarGridSpec(
            num_scalar_prefetch=0,
            grid=(n_par, n_inner),
            in_specs=[in_spec, in_spec],
            out_specs=pl.BlockSpec((1, 8, LANES), lambda p, i: (p, 0, 0)),
            scratch_shapes=[pltpu.VMEM((8, LANES), jnp.float32)],
        ),
        compiler_params=pltpu.CompilerParams(
            dimension_semantics=("parallel", "arbitrary"),
        ),
    )(x3, y3)

    # Tiny final reduce (at most 2 x 8 x 128 pre-scaled partials).
    return jnp.sum(partials)


def _reference(inputs, targets):
    x = inputs.astype(jnp.float32)
    y = targets.astype(jnp.float32)
    loss = jnp.maximum(x, 0.0) - x * y + jnp.log1p(jnp.exp(-jnp.abs(x)))
    return jnp.mean(loss)


if __name__ == "__main__":
    key = jax.random.PRNGKey(0)
    k1, k2 = jax.random.split(key)

    # Small NCHW shapes consistent with a classification head's logits map.
    B, C, H, W = 2, 4, 16, 16
    logits = jax.random.normal(k1, (B, C, H, W), dtype=jnp.float32)
    targets = (jax.random.uniform(k2, (B, C, H, W)) > 0.5).astype(jnp.float32)

    loss = jax.jit(bce_with_logits_loss)(logits, targets)
    loss = jax.block_until_ready(loss)

    ref = _reference(logits, targets)
    assert jnp.allclose(loss, ref, atol=1e-5, rtol=1e-5), (loss, ref)

    print("KERNEL_OK")
</pallas_src>

<mosaic_0001>
module attributes {stable_mosaic.version = 11 : i64} {
  func.func @_bce_kernel(%arg0: i32, %arg1: i32, %arg2: memref<1x16x128xf32, #tpu.memory_space<vmem>>, %arg3: memref<1x16x128xf32, #tpu.memory_space<vmem>>, %arg4: memref<1x8x128xf32, #tpu.memory_space<vmem>>, %arg5: memref<8x128xf32, #tpu.memory_space<vmem>>) attributes {dimension_semantics = [#tpu.dimension_semantics<parallel>, #tpu.dimension_semantics<arbitrary>], iteration_bounds = array<i64: 1, 1>, scalar_prefetch = 0 : i64, scratch_operands = 1 : i64, tpu.core_type = #tpu.core_type<tc>, window_params = [{transform_indices = @transform_0, window_bounds = array<i64: 1, 16, 128>}, {transform_indices = @transform_1, window_bounds = array<i64: 1, 16, 128>}, {transform_indices = @transform_2, window_bounds = array<i64: 1, 8, 128>}]} {
    %c0_i32 = arith.constant 0 : i32
    %0 = arith.cmpi eq, %arg1, %c0_i32 : i32
    %1 = arith.extui %0 : i1 to i32
    %c0_i32_0 = arith.constant 0 : i32
    %2 = arith.cmpi ne, %1, %c0_i32_0 : i32
    scf.if %2 {
      %cst_14 = arith.constant 0.000000e+00 : f32
      %25 = vector.broadcast %cst_14 : f32 to vector<8x128xf32>
      %c0_15 = arith.constant 0 : index
      %c0_16 = arith.constant 0 : index
      %26 = vector.load %arg5[%c0_15, %c0_16] : memref<8x128xf32, #tpu.memory_space<vmem>>, vector<8x128xf32>
      tpu.vector_store %arg5[%c0_15, %c0_16], %25 {strides = array<i32>} : memref<8x128xf32, #tpu.memory_space<vmem>>, vector<8x128xf32>,
    } else {
    }
    %c0 = arith.constant 0 : index
    %c0_1 = arith.constant 0 : index
    %c0_2 = arith.constant 0 : index
    %3 = vector.load %arg2[%c0, %c0_1, %c0_2] : memref<1x16x128xf32, #tpu.memory_space<vmem>>, vector<1x16x128xf32>
    %4 = vector.shape_cast %3 : vector<1x16x128xf32> to vector<16x128xf32>
    %c0_3 = arith.constant 0 : index
    %c0_4 = arith.constant 0 : index
    %c0_5 = arith.constant 0 : index
    %5 = vector.load %arg3[%c0_3, %c0_4, %c0_5] : memref<1x16x128xf32, #tpu.memory_space<vmem>>, vector<1x16x128xf32>
    %6 = vector.shape_cast %5 : vector<1x16x128xf32> to vector<16x128xf32>
    %cst = arith.constant 0.000000e+00 : f32
    %7 = vector.broadcast %cst : f32 to vector<16x128xf32>
    %8 = arith.maximumf %4, %7 : vector<16x128xf32>
    %9 = arith.mulf %4, %6 : vector<16x128xf32>
    %10 = arith.subf %8, %9 : vector<16x128xf32>
    %11 = math.absf %4 : vector<16x128xf32>
    %cst_6 = arith.constant 0.000000e+00 : f32
    %12 = vector.broadcast %cst_6 : f32 to vector<16x128xf32>
    %13 = arith.subf %12, %11 : vector<16x128xf32>
    %14 = math.exp %13 : vector<16x128xf32>
    %15 = math.log1p %14 : vector<16x128xf32>
    %16 = arith.addf %10, %15 : vector<16x128xf32>
    %c0_7 = arith.constant 0 : index
    %c0_8 = arith.constant 0 : index
    %17 = vector.load %arg5[%c0_7, %c0_8] : memref<8x128xf32, #tpu.memory_space<vmem>>, vector<8x128xf32>
    %18 = vector.shape_cast %16 : vector<16x128xf32> to vector<2x8x128xf32>
    %cst_9 = arith.constant dense<0.000000e+00> : vector<8x128xf32>
    %19 = vector.multi_reduction <add>, %18, %cst_9 [0] : vector<2x8x128xf32> to vector<8x128xf32>
    %20 = arith.addf %17, %19 : vector<8x128xf32>
    %c0_10 = arith.constant 0 : index
    %c0_11 = arith.constant 0 : index
    %21 = vector.load %arg5[%c0_10, %c0_11] : memref<8x128xf32, #tpu.memory_space<vmem>>, vector<8x128xf32>
    tpu.vector_store %arg5[%c0_10, %c0_11], %20 {strides = array<i32>} : memref<8x128xf32, #tpu.memory_space<vmem>>, vector<8x128xf32>,
    %c0_i32_12 = arith.constant 0 : i32
    %22 = arith.cmpi eq, %arg1, %c0_i32_12 : i32
    %23 = arith.extui %22 : i1 to i32
    %c0_i32_13 = arith.constant 0 : i32
    %24 = arith.cmpi ne, %23, %c0_i32_13 : i32
    scf.if %24 {
      %c0_14 = arith.constant 0 : index
      %c0_15 = arith.constant 0 : index
      %25 = vector.load %arg5[%c0_14, %c0_15] : memref<8x128xf32, #tpu.memory_space<vmem>>, vector<8x128xf32>
      %cst_16 = arith.constant 4.8828125E-4 : f32
      %26 = vector.broadcast %cst_16 : f32 to vector<8x128xf32>
      %27 = arith.mulf %25, %26 : vector<8x128xf32>
      %c0_17 = arith.constant 0 : index
      %c0_18 = arith.constant 0 : index
      %c0_19 = arith.constant 0 : index
      %28 = vector.load %arg4[%c0_17, %c0_18, %c0_19] : memref<1x8x128xf32, #tpu.memory_space<vmem>>, vector<1x8x128xf32>
      %29 = vector.shape_cast %28 : vector<1x8x128xf32> to vector<8x128xf32>
      %30 = vector.shape_cast %27 : vector<8x128xf32> to vector<1x8x128xf32>
      tpu.vector_store %arg4[%c0_17, %c0_18, %c0_19], %30 {strides = array<i32>} : memref<1x8x128xf32, #tpu.memory_space<vmem>>, vector<1x8x128xf32>,
    } else {
    }
    return
  }
  func.func @transform_0(%arg0: i32, %arg1: i32) -> (i32, i32, i32) {
    %c0_i32 = arith.constant 0 : i32
    %c0_i32_0 = arith.constant 0 : i32
    return %arg0, %arg1, %c0_i32 : i32, i32, i32
  }
  func.func @transform_1(%arg0: i32, %arg1: i32) -> (i32, i32, i32) {
    %c0_i32 = arith.constant 0 : i32
    %c0_i32_0 = arith.constant 0 : i32
    return %arg0, %arg1, %c0_i32 : i32, i32, i32
  }
  func.func @transform_2(%arg0: i32, %arg1: i32) -> (i32, i32, i32) {
    %c0_i32 = arith.constant 0 : i32
    %c0_i32_0 = arith.constant 0 : i32
    %c0_i32_1 = arith.constant 0 : i32
    return %arg0, %c0_i32, %c0_i32_0 : i32, i32, i32
  }
}

</mosaic_0001>

<llo_original>
// kernel: bce_with_logits_loss.1
$region0: #{bce_with_logits_loss.1}
  #allocation0 [shape = 'u32[]', space=smem, size = 0x4, offset = 0x4, fixed_abs, tag = 'smem constant byte address 0x4 - core index']
  #allocation1 [shape = 'u32[144,128]{1,0:T(1,128)}', space=vmem, size = 0x12000, scoped, tag = 'internal scratch']
  #allocation2 [shape = 'f32[8,128]{1,0:T(8,128)}', space=vmem, size = 0x1000, scoped, tag = 'scratch operand']
  %s0 = inlined_call_operand.vmem [shape: f32[1,16,128], index: 0, kind: input, shape index: {}]
  %s1 = inlined_call_operand.vmem [shape: f32[1,16,128], index: 1, kind: input, shape index: {}]
  %s2 = inlined_call_operand.vmem [shape: f32[1,8,128], index: 2, kind: output, shape index: {}]
  %s3 = sld [smem:[#allocation0]]
  $region26: #{bce_with_logits_loss.1} parent=0
    _
  %s5 = ssub.s32 1, %s3
  %s6 = scalar_select 0, %s5, %s3
  // Predicated region
  $region2: #{bce_with_logits_loss.1} parent=0 // pred_check
    _
  $region3: #{bce_with_logits_loss.1} parent=0 // pred_check_branch
    %8 = sbr.rel (0) target = $region5
  $region4: #{bce_with_logits_loss.1} parent=0 // pred_region
    _
  $region5: #{bce_with_logits_loss.1} parent=0 // pred_fallthru
    _
  // Predicated region
  $region6: #{bce_with_logits_loss.1} parent=0 // pred_check
    _
  $region7: #{bce_with_logits_loss.1} parent=0 // pred_check_branch
    %10 = sbr.rel (0) target = $region9
  $region8: #{bce_with_logits_loss.1} parent=0 // pred_region
    _
  $region9: #{bce_with_logits_loss.1} parent=0 // pred_fallthru
    _
  %p11 = scmp.eq.s32.totalorder 0, 0
  // Predicated region
  $region10: #{bce_with_logits_loss.1} parent=0 // pred_check
    %p12 = pneg %p11
  $region11: #{bce_with_logits_loss.1} parent=0 // pred_check_branch
    %14 = sbr.rel (%p12) target = $region13
  $region12: #{bce_with_logits_loss.1} parent=0 // pred_region
    %15 = vst [vmem:[#allocation2] sm:$0xff] 0.0
  $region13: #{bce_with_logits_loss.1} parent=0 // pred_fallthru
    _
  %v16 = vld [vmem:[%s0] sm:$0xff]
  %v17 = vld [vmem:[%s0 + $0x8] sm:$0xff]
  %v18 = vld [vmem:[%s1] sm:$0xff]
  %v19 = vld [vmem:[%s1 + $0x8] sm:$0xff]
  %v20 = vmax.f32 %v16, 0.0
  %v21 = vmax.f32 %v17, 0.0
  %v22 = vmul.f32 %v16, %v18
  %v23 = vmul.f32 %v17, %v19
  %v24 = vsub.f32 %v20, %v22
  %v25 = vsub.f32 %v21, %v23
  %v26 = vand.u32 2147483647, %v16
  %v27 = vand.u32 2147483647, %v17
  %v28 = vsub.f32 0.0, %v26
  %v29 = vsub.f32 0.0, %v27
  %v30 = vmul.f32 %v28, 1.442695
  %v31 = vpow.pop %v30
  %v32 = vmul.f32 %v29, 1.442695
  %v33 = vpow.pop %v32
  %v34 = vadd.f32 %v31, 1.0
  %v35 = vlog2.pop %v34
  %v36 = vmul.f32 %v35, 0.6931472
  %v37 = vmul.f32 -0.5, %v31
  %v38 = vadd.f32 %v37, 1.0
  %v39 = vmul.f32 %v38, %v31
  %v40 = vand.u32 2147483647, %v31
  %vm41 = vcmp.lt.f32.partialorder %v40, 0.0004427343
  %v42 = vsel %vm41, %v39, %v36
  %v43 = vadd.f32 %v33, 1.0
  %v44 = vlog2.pop %v43
  %v45 = vmul.f32 %v44, 0.6931472
  %v46 = vmul.f32 -0.5, %v33
  %v47 = vadd.f32 %v46, 1.0
  %v48 = vmul.f32 %v47, %v33
  %v49 = vand.u32 2147483647, %v33
  %vm50 = vcmp.lt.f32.partialorder %v49, 0.0004427343
  %v51 = vsel %vm50, %v48, %v45
  %v52 = vadd.f32 %v24, %v42
  %v53 = vadd.f32 %v25, %v51
  %v54 = vld [vmem:[#allocation2] sm:$0xff]
  %v55 = vadd.f32 %v52, %v53
  %v56 = vadd.f32 %v54, %v55
  %57 = vst [vmem:[#allocation2] sm:$0xff] %v56
  // Predicated region
  $region14: #{bce_with_logits_loss.1} parent=0 // pred_check
    %p58 = pneg %p11
  $region15: #{bce_with_logits_loss.1} parent=0 // pred_check_branch
    %60 = sbr.rel (%p58) target = $region17
  $region16: #{bce_with_logits_loss.1} parent=0 // pred_region
    %v61 = vld [vmem:[#allocation2] sm:$0xff]
    %v62 = vmul.f32 %v61, 0.00048828125
    %63 = vst [vmem:[%s2] sm:$0xff] %v62
  $region17: #{bce_with_logits_loss.1} parent=0 // pred_fallthru
    _
  // Predicated region
  $region18: #{bce_with_logits_loss.1} parent=0 // pred_check
    _
  $region19: #{bce_with_logits_loss.1} parent=0 // pred_check_branch
    %65 = sbr.rel (0) target = $region21
  $region20: #{bce_with_logits_loss.1} parent=0 // pred_region
    _
  $region21: #{bce_with_logits_loss.1} parent=0 // pred_fallthru
    _
  // Predicated region
  $region22: #{bce_with_logits_loss.1} parent=0 // pred_check
    _
  $region23: #{bce_with_logits_loss.1} parent=0 // pred_check_branch
    %67 = sbr.rel (0) target = $region25
  $region24: #{bce_with_logits_loss.1} parent=0 // pred_region
    _
  $region25: #{bce_with_logits_loss.1} parent=0 // pred_fallthru
    _

</llo_original>
